<compile_context>
chip_gen: v6e
topology: v6e:2x2x1
jax: 0.10.0
libtpu: 0.0.40
codegen_flags: <defaults>
</compile_context>

<pallas_src>
import functools

import jax
import jax.numpy as jnp
from jax import lax
from jax.experimental import pallas as pl
from jax.experimental.pallas import tpu as pltpu

_EPS = 1e-8
_EPS_SQ = _EPS * _EPS


def _round_up(x: int, m: int) -> int:
    return ((x + m - 1) // m) * m


def _simsiam_kernel(p1_ref, z2_ref, p2_ref, z1_ref, out_ref, acc_ref,
                    *, tile_rows, batch, scale):
    """One batch tile: accumulate sum of cos(p1,z2) + cos(p2,z1) over rows.

    Grid is (n_outer["parallel"], n_inner["arbitrary"]); each outer index owns
    a contiguous chunk of tiles and writes its own scaled partial sum.
    """
    c = pl.program_id(0)          # megacore / partial-sum axis
    i = pl.program_id(1)          # reduction axis over batch tiles
    n_inner = pl.num_programs(1)

    @pl.when(i == 0)
    def _init():
        acc_ref[...] = jnp.zeros_like(acc_ref)

    # Row mask for the ragged last tile (and for out-of-range padded reads).
    row0 = (c * n_inner + i) * tile_rows
    row_ids = row0 + lax.broadcasted_iota(jnp.int32, (tile_rows, 1), 0)
    valid = row_ids < batch

    def _cos(a_ref, b_ref):
        a = a_ref[...].astype(jnp.float32)
        b = b_ref[...].astype(jnp.float32)
        dot = jnp.sum(a * b, axis=-1, keepdims=True)     # (tb, 1)
        a_sq = jnp.sum(a * a, axis=-1, keepdims=True)
        b_sq = jnp.sum(b * b, axis=-1, keepdims=True)
        # 1 / (max(||a||,eps) * max(||b||,eps)) with a single rsqrt (EUP).
        inv = lax.rsqrt(jnp.maximum(a_sq, _EPS_SQ) * jnp.maximum(b_sq, _EPS_SQ))
        return jnp.where(valid, dot * inv, 0.0)

    cos = _cos(p1_ref, z2_ref) + _cos(p2_ref, z1_ref)     # (tb, 1)
    acc_ref[...] += jnp.sum(cos, axis=0, keepdims=True)   # (1, 1) VMEM

    @pl.when(i == n_inner - 1)
    def _finalize():
        # scale = -1 / (2B)  ->  out holds this core's share of the loss.
        out_ref[...] = jnp.broadcast_to(acc_ref[...] * scale, out_ref.shape)


def simsiam_loss(x1, x2, *, max_rows_per_tile: int = 2048):
    """x1 = (p1, z1), x2 = (p2, z2); each tensor (B, D). Returns scalar f32."""
    p1, z1 = x1
    p2, z2 = x2
    # z1, z2 are detached in PyTorch; forward value unchanged.
    z1 = lax.stop_gradient(z1)
    z2 = lax.stop_gradient(z2)

    assert p1.shape == z1.shape == p2.shape == z2.shape
    B, D = p1.shape

    itemsize = jnp.dtype(p1.dtype).itemsize
    sublane = max(8, 32 // itemsize)        # f32 -> 8, bf16 -> 16, int8 -> 32
    d_pad = _round_up(D, 128)               # lane-padded width for VMEM math

    # 4 input streams x 2 pipeline buffers of (tb, d_pad) tiles within ~32 MiB
    # (<= 4 MiB per buffer -> safe on v7x's 64 MiB VMEM, large enough to
    # amortize per-step overhead on v5e/v6e).
    budget_bytes = 32 * 1024 * 1024
    tb_cap = max(sublane, budget_bytes // (4 * 2 * d_pad * itemsize))
    tb = min(max_rows_per_tile, tb_cap, _round_up(B, sublane))
    tb = max(sublane, (tb // sublane) * sublane)

    n_tiles = (B + tb - 1) // tb
    # Two partial sums (one per TensorCore on v7x) when the tile count splits
    # evenly; otherwise a single reduction chain.
    n_outer = 2 if (n_tiles >= 2 and n_tiles % 2 == 0) else 1
    n_inner = n_tiles // n_outer

    def in_map(c, i):
        return (c * n_inner + i, 0)

    in_spec = pl.BlockSpec((tb, D), in_map)

    # Derived VMEM limit: actual buffer bytes + 25% + 2 MiB margin, capped.
    buf_bytes = 4 * 2 * tb * d_pad * itemsize
    vmem_limit = int(min(48 * 1024 * 1024,
                         max(16 * 1024 * 1024,
                             buf_bytes + buf_bytes // 4 + (2 << 20))))

    kernel = functools.partial(
        _simsiam_kernel, tile_rows=tb, batch=B, scale=-1.0 / (2.0 * B))

    out = pl.pallas_call(
        kernel,
        out_shape=jax.ShapeDtypeStruct((n_outer, 8, 128), jnp.float32),
        grid_spec=pltpu.PrefetchScalarGridSpec(
            num_scalar_prefetch=0,
            grid=(n_outer, n_inner),
            in_specs=[in_spec, in_spec, in_spec, in_spec],
            out_specs=pl.BlockSpec((1, 8, 128), lambda c, i: (c, 0, 0)),
            scratch_shapes=[pltpu.VMEM((1, 1), jnp.float32)],
        ),
        compiler_params=pltpu.CompilerParams(
            dimension_semantics=("parallel", "arbitrary"),
            vmem_limit_bytes=vmem_limit,
        ),
    )(p1, z2, p2, z1)

    # Sum the (1 or 2) per-core scaled partials -> final scalar loss.
    return jnp.sum(out[:, 0, 0])


if __name__ == "__main__":
    def _ref_loss(p1, z1, p2, z2):
        def neg_cos(x, y):
            x = x.astype(jnp.float32)
            y = y.astype(jnp.float32)
            dot = jnp.sum(x * y, axis=1)
            xn = jnp.maximum(jnp.linalg.norm(x, axis=1), _EPS)
            yn = jnp.maximum(jnp.linalg.norm(y, axis=1), _EPS)
            return -jnp.mean(dot / (xn * yn))
        return 0.5 * (neg_cos(p1, z2) + neg_cos(p2, z1))

    key = jax.random.PRNGKey(0)

    # Test 1: small f32 case (single tile).
    k1, k2, k3, k4, key = jax.random.split(key, 5)
    B, D = 8, 32
    p1 = jax.random.normal(k1, (B, D), dtype=jnp.float32)
    z1 = jax.random.normal(k2, (B, D), dtype=jnp.float32)
    p2 = jax.random.normal(k3, (B, D), dtype=jnp.float32)
    z2 = jax.random.normal(k4, (B, D), dtype=jnp.float32)
    loss = jax.block_until_ready(simsiam_loss((p1, z1), (p2, z2)))
    ref = _ref_loss(p1, z1, p2, z2)
    assert jnp.allclose(loss, ref, atol=1e-5), (loss, ref)

    # Test 2: ragged batch + multi-tile accumulation + two partial sums
    # (B=90, tb=16 -> 6 tiles -> n_outer=2, last tile masked).
    k1, k2, k3, k4, key = jax.random.split(key, 5)
    B, D = 90, 64
    p1 = jax.random.normal(k1, (B, D), dtype=jnp.float32)
    z1 = jax.random.normal(k2, (B, D), dtype=jnp.float32)
    p2 = jax.random.normal(k3, (B, D), dtype=jnp.float32)
    z2 = jax.random.normal(k4, (B, D), dtype=jnp.float32)
    loss = jax.block_until_ready(
        simsiam_loss((p1, z1), (p2, z2), max_rows_per_tile=16))
    ref = _ref_loss(p1, z1, p2, z2)
    assert jnp.allclose(loss, ref, atol=1e-5), (loss, ref)

    # Test 3: bf16 inputs (16-row sublane alignment, ragged, cast after load).
    k1, k2, k3, k4, key = jax.random.split(key, 5)
    B, D = 24, 128
    p1 = jax.random.normal(k1, (B, D), dtype=jnp.bfloat16)
    z1 = jax.random.normal(k2, (B, D), dtype=jnp.bfloat16)
    p2 = jax.random.normal(k3, (B, D), dtype=jnp.bfloat16)
    z2 = jax.random.normal(k4, (B, D), dtype=jnp.bfloat16)
    loss = jax.block_until_ready(simsiam_loss((p1, z1), (p2, z2)))
    ref = _ref_loss(p1, z1, p2, z2)
    assert jnp.allclose(loss, ref, atol=1e-4), (loss, ref)

    print("KERNEL_OK")
</pallas_src>

<mosaic_0001>
module attributes {stable_mosaic.version = 11 : i64} {
  func.func @_simsiam_kernel(%arg0: i32, %arg1: i32, %arg2: memref<8x32xf32, #tpu.memory_space<vmem>>, %arg3: memref<8x32xf32, #tpu.memory_space<vmem>>, %arg4: memref<8x32xf32, #tpu.memory_space<vmem>>, %arg5: memref<8x32xf32, #tpu.memory_space<vmem>>, %arg6: memref<1x8x128xf32, #tpu.memory_space<vmem>>, %arg7: memref<1x1xf32, #tpu.memory_space<vmem>>) attributes {dimension_semantics = [#tpu.dimension_semantics<parallel>, #tpu.dimension_semantics<arbitrary>], iteration_bounds = array<i64: 1, 1>, scalar_prefetch = 0 : i64, scratch_operands = 1 : i64, tpu.core_type = #tpu.core_type<tc>, window_params = [{transform_indices = @transform_0, window_bounds = array<i64: 8, 32>}, {transform_indices = @transform_1, window_bounds = array<i64: 8, 32>}, {transform_indices = @transform_2, window_bounds = array<i64: 8, 32>}, {transform_indices = @transform_3, window_bounds = array<i64: 8, 32>}, {transform_indices = @transform_4, window_bounds = array<i64: 1, 8, 128>}]} {
    %c0_i32 = arith.constant 0 : i32
    %0 = arith.cmpi eq, %arg1, %c0_i32 : i32
    %1 = arith.extui %0 : i1 to i32
    %c0_i32_0 = arith.constant 0 : i32
    %2 = arith.cmpi ne, %1, %c0_i32_0 : i32
    scf.if %2 {
      %cst_27 = arith.constant 0.000000e+00 : f32
      %60 = vector.broadcast %cst_27 : f32 to vector<1x1xf32>
      %c0_28 = arith.constant 0 : index
      %c0_29 = arith.constant 0 : index
      %61 = vector.load %arg7[%c0_28, %c0_29] : memref<1x1xf32, #tpu.memory_space<vmem>>, vector<1x1xf32>
      tpu.vector_store %arg7[%c0_28, %c0_29], %60 {strides = array<i32>} : memref<1x1xf32, #tpu.memory_space<vmem>>, vector<1x1xf32>,
    } else {
    }
    %c1_i32 = arith.constant 1 : i32
    %3 = arith.muli %arg0, %c1_i32 : i32
    %4 = arith.addi %3, %arg1 : i32
    %c8_i32 = arith.constant 8 : i32
    %5 = arith.muli %4, %c8_i32 : i32
    %6 = tpu.iota {dimensions = array<i32: 0>} : vector<8x1xi32>
    %7 = vector.broadcast %5 : i32 to vector<8x1xi32>
    %8 = arith.addi %7, %6 : vector<8x1xi32>
    %c8_i32_1 = arith.constant 8 : i32
    %9 = vector.broadcast %c8_i32_1 : i32 to vector<8x1xi32>
    %10 = arith.cmpi slt, %8, %9 : vector<8x1xi32>
    %c0 = arith.constant 0 : index
    %c0_2 = arith.constant 0 : index
    %11 = vector.load %arg2[%c0, %c0_2] : memref<8x32xf32, #tpu.memory_space<vmem>>, vector<8x32xf32>
    %c0_3 = arith.constant 0 : index
    %c0_4 = arith.constant 0 : index
    %12 = vector.load %arg3[%c0_3, %c0_4] : memref<8x32xf32, #tpu.memory_space<vmem>>, vector<8x32xf32>
    %13 = arith.mulf %11, %12 : vector<8x32xf32>
    %cst = arith.constant dense<0.000000e+00> : vector<8xf32>
    %14 = vector.multi_reduction <add>, %13, %cst [1] : vector<8x32xf32> to vector<8xf32>
    %15 = vector.shape_cast %14 : vector<8xf32> to vector<8x1xf32>
    %16 = arith.mulf %11, %11 : vector<8x32xf32>
    %cst_5 = arith.constant dense<0.000000e+00> : vector<8xf32>
    %17 = vector.multi_reduction <add>, %16, %cst_5 [1] : vector<8x32xf32> to vector<8xf32>
    %18 = vector.shape_cast %17 : vector<8xf32> to vector<8x1xf32>
    %19 = arith.mulf %12, %12 : vector<8x32xf32>
    %cst_6 = arith.constant dense<0.000000e+00> : vector<8xf32>
    %20 = vector.multi_reduction <add>, %19, %cst_6 [1] : vector<8x32xf32> to vector<8xf32>
    %21 = vector.shape_cast %20 : vector<8xf32> to vector<8x1xf32>
    %cst_7 = arith.constant 1.000000e-16 : f32
    %22 = vector.broadcast %cst_7 : f32 to vector<8x1xf32>
    %23 = arith.maximumf %18, %22 : vector<8x1xf32>
    %cst_8 = arith.constant 1.000000e-16 : f32
    %24 = vector.broadcast %cst_8 : f32 to vector<8x1xf32>
    %25 = arith.maximumf %21, %24 : vector<8x1xf32>
    %26 = arith.mulf %23, %25 : vector<8x1xf32>
    %27 = math.rsqrt %26 : vector<8x1xf32>
    %28 = arith.mulf %15, %27 : vector<8x1xf32>
    %cst_9 = arith.constant 0.000000e+00 : f32
    %29 = vector.broadcast %cst_9 : f32 to vector<8x1xf32>
    %30 = arith.select %10, %28, %29 : vector<8x1xi1>, vector<8x1xf32>
    %c0_10 = arith.constant 0 : index
    %c0_11 = arith.constant 0 : index
    %31 = vector.load %arg4[%c0_10, %c0_11] : memref<8x32xf32, #tpu.memory_space<vmem>>, vector<8x32xf32>
    %c0_12 = arith.constant 0 : index
    %c0_13 = arith.constant 0 : index
    %32 = vector.load %arg5[%c0_12, %c0_13] : memref<8x32xf32, #tpu.memory_space<vmem>>, vector<8x32xf32>
    %33 = arith.mulf %31, %32 : vector<8x32xf32>
    %cst_14 = arith.constant dense<0.000000e+00> : vector<8xf32>
    %34 = vector.multi_reduction <add>, %33, %cst_14 [1] : vector<8x32xf32> to vector<8xf32>
    %35 = vector.shape_cast %34 : vector<8xf32> to vector<8x1xf32>
    %36 = arith.mulf %31, %31 : vector<8x32xf32>
    %cst_15 = arith.constant dense<0.000000e+00> : vector<8xf32>
    %37 = vector.multi_reduction <add>, %36, %cst_15 [1] : vector<8x32xf32> to vector<8xf32>
    %38 = vector.shape_cast %37 : vector<8xf32> to vector<8x1xf32>
    %39 = arith.mulf %32, %32 : vector<8x32xf32>
    %cst_16 = arith.constant dense<0.000000e+00> : vector<8xf32>
    %40 = vector.multi_reduction <add>, %39, %cst_16 [1] : vector<8x32xf32> to vector<8xf32>
    %41 = vector.shape_cast %40 : vector<8xf32> to vector<8x1xf32>
    %cst_17 = arith.constant 1.000000e-16 : f32
    %42 = vector.broadcast %cst_17 : f32 to vector<8x1xf32>
    %43 = arith.maximumf %38, %42 : vector<8x1xf32>
    %cst_18 = arith.constant 1.000000e-16 : f32
    %44 = vector.broadcast %cst_18 : f32 to vector<8x1xf32>
    %45 = arith.maximumf %41, %44 : vector<8x1xf32>
    %46 = arith.mulf %43, %45 : vector<8x1xf32>
    %47 = math.rsqrt %46 : vector<8x1xf32>
    %48 = arith.mulf %35, %47 : vector<8x1xf32>
    %cst_19 = arith.constant 0.000000e+00 : f32
    %49 = vector.broadcast %cst_19 : f32 to vector<8x1xf32>
    %50 = arith.select %10, %48, %49 : vector<8x1xi1>, vector<8x1xf32>
    %51 = arith.addf %30, %50 : vector<8x1xf32>
    %c0_20 = arith.constant 0 : index
    %c0_21 = arith.constant 0 : index
    %52 = vector.load %arg7[%c0_20, %c0_21] : memref<1x1xf32, #tpu.memory_space<vmem>>, vector<1x1xf32>
    %cst_22 = arith.constant dense<0.000000e+00> : vector<1xf32>
    %53 = vector.multi_reduction <add>, %51, %cst_22 [0] : vector<8x1xf32> to vector<1xf32>
    %54 = vector.shape_cast %53 : vector<1xf32> to vector<1x1xf32>
    %55 = arith.addf %52, %54 : vector<1x1xf32>
    %c0_23 = arith.constant 0 : index
    %c0_24 = arith.constant 0 : index
    %56 = vector.load %arg7[%c0_23, %c0_24] : memref<1x1xf32, #tpu.memory_space<vmem>>, vector<1x1xf32>
    tpu.vector_store %arg7[%c0_23, %c0_24], %55 {strides = array<i32>} : memref<1x1xf32, #tpu.memory_space<vmem>>, vector<1x1xf32>,
    %c0_i32_25 = arith.constant 0 : i32
    %57 = arith.cmpi eq, %arg1, %c0_i32_25 : i32
    %58 = arith.extui %57 : i1 to i32
    %c0_i32_26 = arith.constant 0 : i32
    %59 = arith.cmpi ne, %58, %c0_i32_26 : i32
    scf.if %59 {
      %c0_27 = arith.constant 0 : index
      %c0_28 = arith.constant 0 : index
      %60 = vector.load %arg7[%c0_27, %c0_28] : memref<1x1xf32, #tpu.memory_space<vmem>>, vector<1x1xf32>
      %cst_29 = arith.constant -6.250000e-02 : f32
      %61 = vector.broadcast %cst_29 : f32 to vector<1x1xf32>
      %62 = arith.mulf %60, %61 : vector<1x1xf32>
      %63 = vector.shape_cast %62 : vector<1x1xf32> to vector<1x1x1xf32>
      %64 = vector.broadcast %63 : vector<1x1x1xf32> to vector<1x8x128xf32>
      %c0_30 = arith.constant 0 : index
      %c0_31 = arith.constant 0 : index
      %c0_32 = arith.constant 0 : index
      %65 = vector.load %arg6[%c0_30, %c0_31, %c0_32] : memref<1x8x128xf32, #tpu.memory_space<vmem>>, vector<1x8x128xf32>
      tpu.vector_store %arg6[%c0_30, %c0_31, %c0_32], %64 {strides = array<i32>} : memref<1x8x128xf32, #tpu.memory_space<vmem>>, vector<1x8x128xf32>,
    } else {
    }
    return
  }
  func.func @transform_0(%arg0: i32, %arg1: i32) -> (i32, i32) {
    %c1_i32 = arith.constant 1 : i32
    %0 = arith.muli %arg0, %c1_i32 : i32
    %1 = arith.addi %0, %arg1 : i32
    %c0_i32 = arith.constant 0 : i32
    %c0_i32_0 = arith.constant 0 : i32
    return %1, %c0_i32 : i32, i32
  }
  func.func @transform_1(%arg0: i32, %arg1: i32) -> (i32, i32) {
    %c1_i32 = arith.constant 1 : i32
    %0 = arith.muli %arg0, %c1_i32 : i32
    %1 = arith.addi %0, %arg1 : i32
    %c0_i32 = arith.constant 0 : i32
    %c0_i32_0 = arith.constant 0 : i32
    return %1, %c0_i32 : i32, i32
  }
  func.func @transform_2(%arg0: i32, %arg1: i32) -> (i32, i32) {
    %c1_i32 = arith.constant 1 : i32
    %0 = arith.muli %arg0, %c1_i32 : i32
    %1 = arith.addi %0, %arg1 : i32
    %c0_i32 = arith.constant 0 : i32
    %c0_i32_0 = arith.constant 0 : i32
    return %1, %c0_i32 : i32, i32
  }
  func.func @transform_3(%arg0: i32, %arg1: i32) -> (i32, i32) {
    %c1_i32 = arith.constant 1 : i32
    %0 = arith.muli %arg0, %c1_i32 : i32
    %1 = arith.addi %0, %arg1 : i32
    %c0_i32 = arith.constant 0 : i32
    %c0_i32_0 = arith.constant 0 : i32
    return %1, %c0_i32 : i32, i32
  }
  func.func @transform_4(%arg0: i32, %arg1: i32) -> (i32, i32, i32) {
    %c0_i32 = arith.constant 0 : i32
    %c0_i32_0 = arith.constant 0 : i32
    %c0_i32_1 = arith.constant 0 : i32
    return %arg0, %c0_i32, %c0_i32_0 : i32, i32, i32
  }
}

</mosaic_0001>

<llo_original>
// kernel: tpu_custom_call.1
$region0: #{tpu_custom_call.1}
  #allocation0 [shape = 'u32[]', space=smem, size = 0x4, offset = 0x4, fixed_abs, tag = 'smem constant byte address 0x4 - core index']
  #allocation1 [shape = 'u32[144,128]{1,0:T(1,128)}', space=vmem, size = 0x12000, scoped, tag = 'internal scratch']
  #allocation2 [shape = 'f32[1,1]{1,0:T(1,128)}', space=vmem, size = 0x200, scoped, tag = 'scratch operand']
  %s0 = inlined_call_operand.hbm [shape: f32[8,32], index: 0, kind: input, shape index: {}]
  %s1 = inlined_call_operand.hbm [shape: f32[8,32], index: 1, kind: input, shape index: {}]
  %s2 = inlined_call_operand.hbm [shape: f32[8,32], index: 2, kind: input, shape index: {}]
  %s3 = inlined_call_operand.hbm [shape: f32[8,32], index: 3, kind: input, shape index: {}]
  %s4 = inlined_call_operand.hbm [shape: f32[1,8,128], index: 4, kind: output, shape index: {}]
  %s5 = sld [smem:[#allocation0]]
  $region50: #{tpu_custom_call.1} parent=0
    _
  %s7 = ssub.s32 1, %s5
  %s8 = scalar_select 0, %s7, %s5
  $region1: #{tpu_custom_call.1} parent=0
    #allocation3 [shape = 'u8[4096]{0}', space=vmem, size = 0x1000, scoped, tag = 'input window, operand 0, single buffered']
    #allocation4 [shape = 's32[1]{0}', space=sflag, size = 0x4, scoped, tag = 'scoped memory for tpu_custom_call.1']
    #allocation5 [shape = 's32[1]{0}', space=sflag, size = 0x4, scoped, tag = 'scoped memory for tpu_custom_call.1']
    #allocation6 [shape = 'u8[4096]{0}', space=vmem, size = 0x1000, scoped, tag = 'input window, operand 1, single buffered']
    #allocation7 [shape = 's32[1]{0}', space=sflag, size = 0x4, scoped, tag = 'scoped memory for tpu_custom_call.1']
    #allocation8 [shape = 'u8[4096]{0}', space=vmem, size = 0x1000, scoped, tag = 'input window, operand 2, single buffered']
    #allocation9 [shape = 'u8[4096]{0}', space=vmem, size = 0x1000, scoped, tag = 'input window, operand 3, single buffered']
    #allocation10 [shape = 's32[1]{0}', space=sflag, size = 0x4, scoped, tag = 'scoped memory for tpu_custom_call.1']
    #allocation11 [shape = 'u8[4096]{0}', space=vmem, size = 0x1000, scoped, tag = 'output window, operand 0, single buffered']
    %9 = vsyncpa [#allocation4], 0
    %10 = vsyncpa [#allocation7], 0
    %11 = vsyncpa [#allocation10], 0
    %12 = vsyncpa [#allocation5], 0
    // Predicated region
    $region2: #{tpu_custom_call.1} parent=1 // pred_check
      _
    $region3: #{tpu_custom_call.1} parent=1 // pred_check_branch
      %14 = sbr.rel (0) target = $region5
    $region4: #{tpu_custom_call.1} parent=1 // pred_region
      %s15 = sadd.s32 0, 0
      %s17 = ssub.s32 128, 128
      %18 = vsyncadd [#allocation4], %s17
      %s19 = smul.addr %s15, 128
      %s20 = scalar_lea.hbm %s0, %s19
      %s22 = sshll.u32 [#allocation3], 4
      %s23 = int_to_ptr.vmem [resolvable:$true] %s22
      %25 = dma.hbm_to_vmem [thread:$0]  %s20, 128, %s23, [#allocation4]
    $region5: #{tpu_custom_call.1} parent=1 // pred_fallthru
      _
    // Predicated region
    $region6: #{tpu_custom_call.1} parent=1 // pred_check
      _
    $region7: #{tpu_custom_call.1} parent=1 // pred_check_branch
      %27 = sbr.rel (0) target = $region9
    $region8: #{tpu_custom_call.1} parent=1 // pred_region
      %s28 = sadd.s32 0, 0
      %s30 = ssub.s32 128, 128
      %31 = vsyncadd [#allocation7], %s30
      %s32 = smul.addr %s28, 128
      %s33 = scalar_lea.hbm %s1, %s32
      %s35 = sshll.u32 [#allocation6], 4
      %s36 = int_to_ptr.vmem [resolvable:$true] %s35
      %38 = dma.hbm_to_vmem [thread:$0]  %s33, 128, %s36, [#allocation7]
    $region9: #{tpu_custom_call.1} parent=1 // pred_fallthru
      _
    // Predicated region
    $region10: #{tpu_custom_call.1} parent=1 // pred_check
      _
    $region11: #{tpu_custom_call.1} parent=1 // pred_check_branch
      %40 = sbr.rel (0) target = $region13
    $region12: #{tpu_custom_call.1} parent=1 // pred_region
      %s41 = sadd.s32 0, 0
      %s43 = ssub.s32 128, 128
      %44 = vsyncadd [#allocation7], %s43
      %s45 = smul.addr %s41, 128
      %s46 = scalar_lea.hbm %s2, %s45
      %s48 = sshll.u32 [#allocation8], 4
      %s49 = int_to_ptr.vmem [resolvable:$true] %s48
      %51 = dma.hbm_to_vmem [thread:$0]  %s46, 128, %s49, [#allocation7]
    $region13: #{tpu_custom_call.1} parent=1 // pred_fallthru
      _
    // Predicated region
    $region14: #{tpu_custom_call.1} parent=1 // pred_check
      _
    $region15: #{tpu_custom_call.1} parent=1 // pred_check_branch
      %53 = sbr.rel (0) target = $region17
    $region16: #{tpu_custom_call.1} parent=1 // pred_region
      %s54 = sadd.s32 0, 0
      %s56 = ssub.s32 128, 128
      %57 = vsyncadd [#allocation10], %s56
      %s58 = smul.addr %s54, 128
      %s59 = scalar_lea.hbm %s3, %s58
      %s61 = sshll.u32 [#allocation9], 4
      %s62 = int_to_ptr.vmem [resolvable:$true] %s61
      %64 = dma.hbm_to_vmem [thread:$0]  %s59, 128, %s62, [#allocation10]
    $region17: #{tpu_custom_call.1} parent=1 // pred_fallthru
      _
    // Predicated region
    $region18: #{tpu_custom_call.1} parent=1 // pred_check
      _
    $region19: #{tpu_custom_call.1} parent=1 // pred_check_branch
      %66 = sbr.rel (0) target = $region21
    $region20: #{tpu_custom_call.1} parent=1 // pred_region
      %67 = dma.done [#allocation4], 128
    $region21: #{tpu_custom_call.1} parent=1 // pred_fallthru
      _
    // Predicated region
    $region22: #{tpu_custom_call.1} parent=1 // pred_check
      _
    $region23: #{tpu_custom_call.1} parent=1 // pred_check_branch
      %69 = sbr.rel (0) target = $region25
    $region24: #{tpu_custom_call.1} parent=1 // pred_region
      %70 = dma.done [#allocation7], 128
    $region25: #{tpu_custom_call.1} parent=1 // pred_fallthru
      _
    // Predicated region
    $region26: #{tpu_custom_call.1} parent=1 // pred_check
      _
    $region27: #{tpu_custom_call.1} parent=1 // pred_check_branch
      %72 = sbr.rel (0) target = $region29
    $region28: #{tpu_custom_call.1} parent=1 // pred_region
      %73 = dma.done [#allocation7], 128
    $region29: #{tpu_custom_call.1} parent=1 // pred_fallthru
      _
    // Predicated region
    $region30: #{tpu_custom_call.1} parent=1 // pred_check
      _
    $region31: #{tpu_custom_call.1} parent=1 // pred_check_branch
      %75 = sbr.rel (0) target = $region33
    $region32: #{tpu_custom_call.1} parent=1 // pred_region
      %76 = dma.done [#allocation10], 128
    $region33: #{tpu_custom_call.1} parent=1 // pred_fallthru
      _
    %s77 = sadd.s32 0, 0
    %s78 = sadd.s32 0, 0
    %s79 = sadd.s32 0, 0
    %s80 = sadd.s32 0, 0
    %p81 = scmp.eq.s32.totalorder 0, 0
    // Predicated region
    $region34: #{tpu_custom_call.1} parent=1 // pred_check
      %p82 = pneg %p81
    $region35: #{tpu_custom_call.1} parent=1 // pred_check_branch
      %84 = sbr.rel (%p82) target = $region37
    $region36: #{tpu_custom_call.1} parent=1 // pred_region
      %vm85 = vcmask 0
      %86 = vst.msk [vmem:[#allocation2] sm:$0x1] %vm85, 0.0
    $region37: #{tpu_custom_call.1} parent=1 // pred_fallthru
      _
    %s87 = sadd.s32 0, 0
    %s88 = smul.u32 %s87, 8
    %v89 = vlaneseq
    %v90 = vshrl.u32 %v89, 7
    %v91 = vstv %s88
    %v92 = vadd.s32 %v91, %v90
    %vm93 = vcmp.lt.s32.totalorder %v92, 8
    %v94 = vld [vmem:[#allocation3] sm:$0xff]
    %v95 = vld [vmem:[#allocation6] sm:$0xff]
    %v96 = vmul.f32 %v94, %v95
    %vm97 = vcmask 261120
    %v98 = vsel %vm97, %v96, 0.0
    %99 = vadd.xlane.f32.xlu0 %v98
    %v100 = vpop.xlane.xlu0 %99
    %v101 = vmul.f32 %v94, %v94
    %v102 = vsel %vm97, %v101, 0.0
    %103 = vadd.xlane.f32.xlu0 %v102
    %v104 = vpop.xlane.xlu0 %103
    %v105 = vmul.f32 %v95, %v95
    %v106 = vsel %vm97, %v105, 0.0
    %107 = vadd.xlane.f32.xlu0 %v106
    %v108 = vpop.xlane.xlu0 %107
    %v109 = vmax.f32 %v104, 1e-16
    %v110 = vmax.f32 %v108, 1e-16
    %v111 = vmul.f32 %v109, %v110
    %v112 = vrsqrt.pop %v111
    %v113 = vmul.f32 %v100, %v112
    %v114 = vsel %vm93, %v113, 0.0
    %v115 = vld [vmem:[#allocation8] sm:$0xff]
    %v116 = vld [vmem:[#allocation9] sm:$0xff]
    %v117 = vmul.f32 %v115, %v116
    %v118 = vsel %vm97, %v117, 0.0
    %119 = vadd.xlane.f32.xlu0 %v118
    %v120 = vpop.xlane.xlu0 %119
    %v121 = vmul.f32 %v115, %v115
    %v122 = vsel %vm97, %v121, 0.0
    %123 = vadd.xlane.f32.xlu0 %v122
    %v124 = vpop.xlane.xlu0 %123
    %v125 = vmul.f32 %v116, %v116
    %v126 = vsel %vm97, %v125, 0.0
    %127 = vadd.xlane.f32.xlu0 %v126
    %v128 = vpop.xlane.xlu0 %127
    %v129 = vmax.f32 %v124, 1e-16
    %v130 = vmax.f32 %v128, 1e-16
    %v131 = vmul.f32 %v129, %v130
    %v132 = vrsqrt.pop %v131
    %v133 = vmul.f32 %v120, %v132
    %v134 = vsel %vm93, %v133, 0.0
    %v135 = vadd.f32 %v114, %v134
    %v136 = vld [vmem:[#allocation2] sm:$0x1]
    %v137 = vrot.slane %v135, 4
    %v138 = vadd.f32 %v135, %v137
    %v139 = vrot.slane %v138, 2
    %v140 = vadd.f32 %v138, %v139
    %v141 = vrot.slane %v140, 1
    %v142 = vadd.f32 %v140, %v141
    %v143 = vadd.f32 %v136, %v142
    %vm144 = vcmask 0
    %145 = vst.msk [vmem:[#allocation2] sm:$0x1] %vm144, %v143
    // Predicated region
    $region38: #{tpu_custom_call.1} parent=1 // pred_check
      %p146 = pneg %p81
    $region39: #{tpu_custom_call.1} parent=1 // pred_check_branch
      %148 = sbr.rel (%p146) target = $region41
    $region40: #{tpu_custom_call.1} parent=1 // pred_region
      %v149 = vld [vmem:[#allocation2] sm:$0x1]
      %v150 = vmul.f32 %v149, -0.0625
      %v152 = vlaneseq
      %v153 = vshrl.u32 %v152, 7
      %v154 = vsub.s32 0, %v153
      %v155 = vrot.slane %v150, %v154
      %156 = vset.pattern.permute.xlu0 0
      %157 = vperm.xlu0 %156, %v155
      %v158 = vpop.permute.xlu0 %157
      %160 = vst [vmem:[#allocation11] sm:$0xff] %v158
    $region41: #{tpu_custom_call.1} parent=1 // pred_fallthru
      _
    // Predicated region
    $region42: #{tpu_custom_call.1} parent=1 // pred_check
      _
    $region43: #{tpu_custom_call.1} parent=1 // pred_check_branch
      %162 = sbr.rel (0) target = $region45
    $region44: #{tpu_custom_call.1} parent=1 // pred_region
      %s164 = ssub.s32 128, 128
      %165 = vsyncadd [#allocation5], %s164
      %s167 = sshll.u32 [#allocation11], 4
      %s168 = int_to_ptr.vmem [resolvable:$true] %s167
      %170 = dma.vmem_to_hbm [thread:$0]  %s168, 128, %s4, [#allocation5]
    $region45: #{tpu_custom_call.1} parent=1 // pred_fallthru
      _
    // Predicated region
    $region46: #{tpu_custom_call.1} parent=1 // pred_check
      _
    $region47: #{tpu_custom_call.1} parent=1 // pred_check_branch
      %172 = sbr.rel (0) target = $region49
    $region48: #{tpu_custom_call.1} parent=1 // pred_region
      %173 = dma.done [#allocation5], 128
    $region49: #{tpu_custom_call.1} parent=1 // pred_fallthru
      _
    %174 = vsyncpa [#allocation4], 1
    %175 = vsyncpa [#allocation7], 1
    %176 = vsyncpa [#allocation10], 1
    %177 = vsyncpa [#allocation5], 1

</llo_original>
